<compile_context>
chip_gen: v7x
topology: tpu7x:2x2x1
jax: 0.10.0
libtpu: 0.0.40
codegen_flags: <defaults>
</compile_context>

<pallas_src>
import jax
import jax.numpy as jnp
from jax.experimental import pallas as pl
from jax.experimental.pallas import tpu as pltpu

LANE = 128     # vreg lane width / v5e MXU tile
SUBLANE = 8    # f32 sublane height


# ----------------------------------------------------------------------------
# helpers
# ----------------------------------------------------------------------------
def _pad_axis(a, axis, multiple):
    pad = (-a.shape[axis]) % multiple
    if pad == 0:
        return a
    widths = [(0, 0)] * a.ndim
    widths[axis] = (0, pad)
    return jnp.pad(a, widths)


def _feature_multiple(dim):
    # 128 is enough (and optimal on v5e) when the dim fits one lane group;
    # 256 feeds the full 2x256x256 MXU contraction/width on v6e/v7x at scale.
    return LANE if dim <= LANE else 2 * LANE


def _pick_batch_tile(total):
    """Adaptive batch tile: big tiles amortize ~0.35us/step pipeline overhead,
    adaptive choice avoids padding a small/odd batch up to 1024."""
    candidates = (1024, 512, 256, 128)
    cands = [c for c in candidates if c <= total]
    if total <= 256:               # small batches: one exact tile (multiple of 8)
        cands.append(total)
    if not cands:
        cands = [total]
    # minimize padding waste; break ties toward the bigger tile
    return min(cands, key=lambda t: ((-total) % t, -t))


def _device_kind():
    try:
        return jax.devices()[0].device_kind.lower()
    except Exception:
        return ""


def _vmem_limit_bytes(kind):
    # v7x: 64 MiB VMEM per TensorCore; v5e/v6e: 128 MiB.
    if "v7" in kind:
        return 48 * 1024 * 1024
    return 100 * 1024 * 1024


def _batch_axis_semantics(kind, grid_b):
    # Only CORE_PARALLEL actually shards a grid axis over v7x's two
    # TensorCores; "parallel" is the safe no-op default elsewhere.
    if "v7" in kind and grid_b % 2 == 0:
        return pltpu.CORE_PARALLEL
    return pltpu.PARALLEL


# ----------------------------------------------------------------------------
# kernel
# ----------------------------------------------------------------------------
def _make_mlp_kernel(mc, n_chunks):
    """out_tile = relu(x_tile @ w1 + b1) @ w2_tile + b2_tile.

    The TB rows are processed in `n_chunks` sub-blocks of `mc` rows so the
    f32 intermediate stays small and the second matmul starts early.
    """

    def kernel(x_ref, w1_ref, b1_ref, w2_ref, b2_ref, o_ref):
        def chunk(c, carry):
            r0 = pl.multiple_of(c * mc, mc)
            # x streams as f32; cast on the VPU right before feeding the MXU
            # (avoids a separate wrapper-side f32->bf16 HBM pass).
            xb = x_ref[pl.ds(r0, mc), :].astype(jnp.bfloat16)
            h = jnp.dot(xb, w1_ref[...], preferred_element_type=jnp.float32)
            h = jnp.maximum(h + b1_ref[...], 0.0)          # f32 epilogue (v5e-safe)
            out = jnp.dot(h.astype(jnp.bfloat16), w2_ref[...],
                          preferred_element_type=jnp.float32)
            out = out + b2_ref[...]
            o_ref[pl.ds(r0, mc), :] = out.astype(o_ref.dtype)
            return carry

        if n_chunks == 1:
            chunk(0, 0)
        else:
            jax.lax.fori_loop(0, n_chunks, chunk, 0, unroll=True)

    return kernel


# ----------------------------------------------------------------------------
# wrapper
# ----------------------------------------------------------------------------
@jax.jit
def ai_forward(x, w1, b1, w2, b2):
    """Fused MLP forward: relu(x @ w1 + b1) @ w2 + b2.

    x: (B, K); w1: (K, H); b1: (H,)|(1, H); w2: (H, N); b2: (N,)|(1, N).
    """
    B, K = x.shape
    H = w1.shape[1]
    N = w2.shape[1]
    out_dtype = x.dtype

    # Lane-dense zero padding of feature dims (exact: padded cols contribute 0,
    # padded bias entries are 0 so padded hidden units are relu(0) = 0).
    x_p = _pad_axis(x.astype(jnp.float32), 1, _feature_multiple(K))
    w1_p = _pad_axis(_pad_axis(w1, 0, _feature_multiple(K)),
                     1, _feature_multiple(H)).astype(jnp.bfloat16)
    b1_p = _pad_axis(b1.reshape(1, -1), 1, _feature_multiple(H)).astype(jnp.float32)
    w2_p = _pad_axis(_pad_axis(w2, 0, _feature_multiple(H)),
                     1, _feature_multiple(N)).astype(jnp.bfloat16)
    b2_p = _pad_axis(b2.reshape(1, -1), 1, _feature_multiple(N)).astype(jnp.float32)

    Kp, Hp = w1_p.shape
    Np = w2_p.shape[1]

    # Adaptive batch tiling.
    x_p = _pad_axis(x_p, 0, SUBLANE)
    TB = _pick_batch_tile(x_p.shape[0])
    x_p = _pad_axis(x_p, 0, TB)
    Bp = x_p.shape[0]
    grid_b = Bp // TB

    # Output-column tiling keeps w2 / f32 out double-buffers inside VMEM at
    # realistic N (hidden is recomputed per N tile; see TODO above for the
    # reduction-axis alternative).  At toy sizes grid_n == 1.
    TN = Np if Np <= 2048 else 2048
    w2_p = _pad_axis(w2_p, 1, TN)
    b2_p = _pad_axis(b2_p, 1, TN)
    Np = w2_p.shape[1]
    grid_n = Np // TN

    # In-kernel M sub-blocking.
    mc = min(TB, 256)
    n_chunks = TB // mc            # TB is either <=256 or a multiple of 256

    kind = _device_kind()
    compiler_params = pltpu.CompilerParams(
        dimension_semantics=(_batch_axis_semantics(kind, grid_b), pltpu.PARALLEL),
        vmem_limit_bytes=_vmem_limit_bytes(kind),
    )

    flops = 2 * Bp * grid_n * Kp * Hp + 2 * Bp * Hp * Np
    bytes_accessed = (x_p.size * 4 + w1_p.size * 2 + b1_p.size * 4
                      + w2_p.size * 2 + b2_p.size * 4 + Bp * Np * 4)

    out_p = pl.pallas_call(
        _make_mlp_kernel(mc, n_chunks),
        out_shape=jax.ShapeDtypeStruct((Bp, Np), jnp.float32),
        grid=(grid_b, grid_n),
        in_specs=[
            pl.BlockSpec((TB, Kp), lambda i, j: (i, 0)),   # x tiles stream over batch
            pl.BlockSpec((Kp, Hp), lambda i, j: (0, 0)),   # w1 resident
            pl.BlockSpec((1, Hp), lambda i, j: (0, 0)),    # b1 resident
            pl.BlockSpec((Hp, TN), lambda i, j: (0, j)),   # w2 column tiles
            pl.BlockSpec((1, TN), lambda i, j: (0, j)),    # b2 column tiles
        ],
        out_specs=pl.BlockSpec((TB, TN), lambda i, j: (i, j)),
        compiler_params=compiler_params,
        cost_estimate=pl.CostEstimate(flops=flops, transcendentals=0,
                                      bytes_accessed=bytes_accessed),
    )(x_p, w1_p, b1_p, w2_p, b2_p)

    return out_p[:B, :N].astype(out_dtype)


# ----------------------------------------------------------------------------
# init + demo
# ----------------------------------------------------------------------------
def init_linear_params(key, fan_in, fan_out, dtype=jnp.float32):
    """Mimics torch.nn.Linear init (uniform +-1/sqrt(fan_in)); weight already
    transposed to (fan_in, fan_out)."""
    kw, kb = jax.random.split(key)
    bound = 1.0 / jnp.sqrt(jnp.float32(fan_in))
    w = jax.random.uniform(kw, (fan_in, fan_out), dtype, minval=-bound, maxval=bound)
    b = jax.random.uniform(kb, (1, fan_out), dtype, minval=-bound, maxval=bound)
    return w, b


if __name__ == "__main__":
    # Small shapes consistent with the module's forward.
    batch, input_size, layer1_size, output_size = 8, 32, 64, 16

    root = jax.random.PRNGKey(0)
    k_x, k_l1, k_l2 = jax.random.split(root, 3)

    x = jax.random.normal(k_x, (batch, input_size), jnp.float32)
    w1, b1 = init_linear_params(k_l1, input_size, layer1_size)
    w2, b2 = init_linear_params(k_l2, layer1_size, output_size)

    out = ai_forward(x, w1, b1, w2, b2)
    jax.block_until_ready(out)
    assert out.shape == (batch, output_size)

    # Reference 1: same bf16-operand / f32-accumulate recipe in plain JAX.
    xb, w1b, w2b = (a.astype(jnp.bfloat16) for a in (x, w1, w2))
    h_ref = jnp.maximum(
        jnp.dot(xb, w1b, preferred_element_type=jnp.float32) + b1, 0.0)
    ref_bf16 = jnp.dot(h_ref.astype(jnp.bfloat16), w2b,
                       preferred_element_type=jnp.float32) + b2
    assert jnp.allclose(out, ref_bf16, atol=5e-3, rtol=5e-3)

    # Reference 2: full-precision f32 module semantics (loose tol for bf16 MXU).
    ref_f32 = jnp.maximum(x @ w1 + b1, 0.0) @ w2 + b2
    assert jnp.allclose(out, ref_f32, atol=5e-2, rtol=5e-2)

    print("KERNEL_OK")
</pallas_src>

<mosaic_0001>
module attributes {stable_mosaic.version = 11 : i64} {
  func.func @kernel(%arg0: i32, %arg1: i32, %arg2: memref<8x128xf32, #tpu.memory_space<vmem>>, %arg3: memref<128x128xbf16, #tpu.memory_space<vmem>>, %arg4: memref<1x128xf32, #tpu.memory_space<vmem>>, %arg5: memref<128x128xbf16, #tpu.memory_space<vmem>>, %arg6: memref<1x128xf32, #tpu.memory_space<vmem>>, %arg7: memref<8x128xf32, #tpu.memory_space<vmem>>) attributes {dimension_semantics = [#tpu.dimension_semantics<parallel>, #tpu.dimension_semantics<parallel>], iteration_bounds = array<i64: 1, 1>, scalar_prefetch = 0 : i64, scratch_operands = 0 : i64, tpu.core_type = #tpu.core_type<tc>, window_params = [{transform_indices = @transform_0, window_bounds = array<i64: 8, 128>}, {pipeline_mode = #tpu.pipeline_mode<synchronous>, transform_indices = @transform_1, window_bounds = array<i64: 128, 128>}, {pipeline_mode = #tpu.pipeline_mode<synchronous>, transform_indices = @transform_2, window_bounds = array<i64: 1, 128>}, {transform_indices = @transform_3, window_bounds = array<i64: 128, 128>}, {transform_indices = @transform_4, window_bounds = array<i64: 1, 128>}, {transform_indices = @transform_5, window_bounds = array<i64: 8, 128>}]} {
    %c0_i32 = arith.constant 0 : i32
    %0 = tpu.assume_multiple %c0_i32, 8 : i32
    %1 = arith.index_cast %0 : i32 to index
    %c0 = arith.constant 0 : index
    %2 = vector.load %arg2[%1, %c0] : memref<8x128xf32, #tpu.memory_space<vmem>>, vector<8x128xf32>
    %3 = arith.truncf %2 : vector<8x128xf32> to vector<8x128xbf16>
    %c0_0 = arith.constant 0 : index
    %c0_1 = arith.constant 0 : index
    %4 = vector.load %arg3[%c0_0, %c0_1] : memref<128x128xbf16, #tpu.memory_space<vmem>>, vector<128x128xbf16>
    %cst = arith.constant dense<0.000000e+00> : vector<8x128xf32>
    %5 = tpu.matmul %3, %4, %cst {dimension_numbers = #tpu.dot_dimension_numbers<[1], [0], [0], [1], [0, 0, 1, 1], [], []>} : vector<8x128xbf16>, vector<128x128xbf16>, vector<8x128xf32> -> vector<8x128xf32>
    %c0_2 = arith.constant 0 : index
    %c0_3 = arith.constant 0 : index
    %6 = vector.load %arg4[%c0_2, %c0_3] : memref<1x128xf32, #tpu.memory_space<vmem>>, vector<1x128xf32>
    %7 = vector.broadcast %6 : vector<1x128xf32> to vector<8x128xf32>
    %8 = arith.addf %5, %7 : vector<8x128xf32>
    %cst_4 = arith.constant 0.000000e+00 : f32
    %9 = vector.broadcast %cst_4 : f32 to vector<8x128xf32>
    %10 = arith.maximumf %8, %9 : vector<8x128xf32>
    %11 = arith.truncf %10 : vector<8x128xf32> to vector<8x128xbf16>
    %c0_5 = arith.constant 0 : index
    %c0_6 = arith.constant 0 : index
    %12 = vector.load %arg5[%c0_5, %c0_6] : memref<128x128xbf16, #tpu.memory_space<vmem>>, vector<128x128xbf16>
    %cst_7 = arith.constant dense<0.000000e+00> : vector<8x128xf32>
    %13 = tpu.matmul %11, %12, %cst_7 {dimension_numbers = #tpu.dot_dimension_numbers<[1], [0], [0], [1], [0, 0, 1, 1], [], []>} : vector<8x128xbf16>, vector<128x128xbf16>, vector<8x128xf32> -> vector<8x128xf32>
    %c0_8 = arith.constant 0 : index
    %c0_9 = arith.constant 0 : index
    %14 = vector.load %arg6[%c0_8, %c0_9] : memref<1x128xf32, #tpu.memory_space<vmem>>, vector<1x128xf32>
    %15 = vector.broadcast %14 : vector<1x128xf32> to vector<8x128xf32>
    %16 = arith.addf %13, %15 : vector<8x128xf32>
    %17 = arith.index_cast %0 : i32 to index
    %c0_10 = arith.constant 0 : index
    %18 = vector.load %arg7[%17, %c0_10] : memref<8x128xf32, #tpu.memory_space<vmem>>, vector<8x128xf32>
    tpu.vector_store %arg7[%17, %c0_10], %16 {strides = array<i32>} : memref<8x128xf32, #tpu.memory_space<vmem>>, vector<8x128xf32>,
    return
  }
  func.func @transform_0(%arg0: i32, %arg1: i32) -> (i32, i32) {
    %c0_i32 = arith.constant 0 : i32
    %c0_i32_0 = arith.constant 0 : i32
    return %arg0, %c0_i32 : i32, i32
  }
  func.func @transform_1(%arg0: i32, %arg1: i32) -> (i32, i32) {
    %c0_i32 = arith.constant 0 : i32
    %c0_i32_0 = arith.constant 0 : i32
    %c0_i32_1 = arith.constant 0 : i32
    return %c0_i32, %c0_i32_0 : i32, i32
  }
  func.func @transform_2(%arg0: i32, %arg1: i32) -> (i32, i32) {
    %c0_i32 = arith.constant 0 : i32
    %c0_i32_0 = arith.constant 0 : i32
    %c0_i32_1 = arith.constant 0 : i32
    return %c0_i32, %c0_i32_0 : i32, i32
  }
  func.func @transform_3(%arg0: i32, %arg1: i32) -> (i32, i32) {
    %c0_i32 = arith.constant 0 : i32
    %c0_i32_0 = arith.constant 0 : i32
    return %c0_i32, %arg1 : i32, i32
  }
  func.func @transform_4(%arg0: i32, %arg1: i32) -> (i32, i32) {
    %c0_i32 = arith.constant 0 : i32
    %c0_i32_0 = arith.constant 0 : i32
    return %c0_i32, %arg1 : i32, i32
  }
  func.func @transform_5(%arg0: i32, %arg1: i32) -> (i32, i32) {
    %c0_i32 = arith.constant 0 : i32
    return %arg0, %arg1 : i32, i32
  }
}

</mosaic_0001>

<llo_original>
// kernel: ai_forward.1
$region0: #{ai_forward.1}
  #allocation0 [shape = 'u32[]', space=smem, size = 0x4, offset = 0x4, fixed_abs, tag = 'smem constant byte address 0x4 - core index']
  #allocation1 [shape = 'u32[144,128]{1,0:T(1,128)}', space=vmem, size = 0x12000, scoped, tag = 'internal scratch']
  %s0 = inlined_call_operand.hbm [shape: f32[8,128], index: 0, kind: input, shape index: {}]
  %s1 = inlined_call_operand.hbm [shape: bf16[128,128], index: 1, kind: input, shape index: {}]
  %s2 = inlined_call_operand.hbm [shape: f32[1,128], index: 2, kind: input, shape index: {}]
  %s3 = inlined_call_operand.hbm [shape: bf16[128,128], index: 3, kind: input, shape index: {}]
  %s4 = inlined_call_operand.hbm [shape: f32[1,128], index: 4, kind: input, shape index: {}]
  %s5 = inlined_call_operand.hbm [shape: f32[8,128], index: 5, kind: output, shape index: {}]
  %s6 = sld [smem:[#allocation0]]
  $region50: #{ai_forward.1} parent=0
    _
  %s8 = ssub.s32 1, %s6
  %s9 = scalar_select 0, %s8, %s6
  $region1: #{ai_forward.1} parent=0
    #allocation2 [shape = 'u8[4096]{0}', space=vmem, size = 0x1000, scoped, tag = 'input window, operand 0, single buffered']
    #allocation3 [shape = 's32[1]{0}', space=sflag, size = 0x4, scoped, tag = 'scoped memory for ai_forward.1']
    #allocation4 [shape = 's32[1]{0}', space=sflag, size = 0x4, scoped, tag = 'scoped memory for ai_forward.1']
    #allocation5 [shape = 'u8[32768]{0}', space=vmem, size = 0x8000, scoped, tag = 'input window, operand 1, single buffered']
    #allocation6 [shape = 's32[1]{0}', space=sflag, size = 0x4, scoped, tag = 'scoped memory for ai_forward.1']
    #allocation7 [shape = 'u8[512]{0}', space=vmem, size = 0x400, scoped, tag = 'input window, operand 2, single buffered']
    #allocation8 [shape = 'u8[32768]{0}', space=vmem, size = 0x8000, scoped, tag = 'input window, operand 3, single buffered']
    #allocation9 [shape = 's32[1]{0}', space=sflag, size = 0x4, scoped, tag = 'scoped memory for ai_forward.1']
    #allocation10 [shape = 'u8[512]{0}', space=vmem, size = 0x400, scoped, tag = 'input window, operand 4, single buffered']
    #allocation11 [shape = 'u8[4096]{0}', space=vmem, size = 0x1000, scoped, tag = 'output window, operand 0, single buffered']
    %10 = vsyncpa [#allocation3], 0
    %11 = vsyncpa [#allocation6], 0
    %12 = vsyncpa [#allocation9], 0
    %13 = vsyncpa [#allocation4], 0
    // Predicated region
    $region2: #{ai_forward.1} parent=1 // pred_check
      _
    $region3: #{ai_forward.1} parent=1 // pred_check_branch
      %15 = sbr.rel (0) target = $region5
    $region4: #{ai_forward.1} parent=1 // pred_region
      %s17 = ssub.s32 128, 128
      %18 = vsyncadd [#allocation3], %s17
      %s20 = sshll.u32 [#allocation2], 4
      %s21 = int_to_ptr.vmem [resolvable:$true] %s20
      %23 = dma.hbm_to_vmem [thread:$0]  %s0, 128, %s21, [#allocation3]
    $region5: #{ai_forward.1} parent=1 // pred_fallthru
      _
    // Predicated region
    $region6: #{ai_forward.1} parent=1 // pred_check
      _
    $region7: #{ai_forward.1} parent=1 // pred_check_branch
      %25 = sbr.rel (0) target = $region9
    $region8: #{ai_forward.1} parent=1 // pred_region
      %s27 = ssub.s32 1024, 1024
      %28 = vsyncadd [#allocation6], %s27
      %s29 = sshll.u32 [#allocation5], 4
      %s30 = int_to_ptr.vmem [resolvable:$true] %s29
      %35 = dma.hbm_to_vmem [thread:$0]  %s1, 1024, %s30, [#allocation6], 64, 64, 4
    $region9: #{ai_forward.1} parent=1 // pred_fallthru
      _
    // Predicated region
    $region10: #{ai_forward.1} parent=1 // pred_check
      _
    $region11: #{ai_forward.1} parent=1 // pred_check_branch
      %37 = sbr.rel (0) target = $region13
    $region12: #{ai_forward.1} parent=1 // pred_region
      %s39 = ssub.s32 16, 16
      %40 = vsyncadd [#allocation6], %s39
      %s42 = sshll.u32 [#allocation7], 4
      %s43 = int_to_ptr.vmem [resolvable:$true] %s42
      %45 = dma.hbm_to_vmem [thread:$0]  %s2, 16, %s43, [#allocation6]
    $region13: #{ai_forward.1} parent=1 // pred_fallthru
      _
    // Predicated region
    $region14: #{ai_forward.1} parent=1 // pred_check
      _
    $region15: #{ai_forward.1} parent=1 // pred_check_branch
      %47 = sbr.rel (0) target = $region17
    $region16: #{ai_forward.1} parent=1 // pred_region
      %s49 = ssub.s32 1024, 1024
      %50 = vsyncadd [#allocation9], %s49
      %s51 = sshll.u32 [#allocation8], 4
      %s52 = int_to_ptr.vmem [resolvable:$true] %s51
      %57 = dma.hbm_to_vmem [thread:$0]  %s3, 1024, %s52, [#allocation9], 64, 64, 4
    $region17: #{ai_forward.1} parent=1 // pred_fallthru
      _
    // Predicated region
    $region18: #{ai_forward.1} parent=1 // pred_check
      _
    $region19: #{ai_forward.1} parent=1 // pred_check_branch
      %59 = sbr.rel (0) target = $region21
    $region20: #{ai_forward.1} parent=1 // pred_region
      %s61 = ssub.s32 16, 16
      %62 = vsyncadd [#allocation9], %s61
      %s64 = sshll.u32 [#allocation10], 4
      %s65 = int_to_ptr.vmem [resolvable:$true] %s64
      %67 = dma.hbm_to_vmem [thread:$0]  %s4, 16, %s65, [#allocation9]
    $region21: #{ai_forward.1} parent=1 // pred_fallthru
      _
    // Predicated region
    $region22: #{ai_forward.1} parent=1 // pred_check
      _
    $region23: #{ai_forward.1} parent=1 // pred_check_branch
      %69 = sbr.rel (0) target = $region25
    $region24: #{ai_forward.1} parent=1 // pred_region
      %70 = dma.done [#allocation3], 128
    $region25: #{ai_forward.1} parent=1 // pred_fallthru
      _
    // Predicated region
    $region26: #{ai_forward.1} parent=1 // pred_check
      _
    $region27: #{ai_forward.1} parent=1 // pred_check_branch
      %72 = sbr.rel (0) target = $region29
    $region28: #{ai_forward.1} parent=1 // pred_region
      %73 = dma.done [#allocation6], 1024
    $region29: #{ai_forward.1} parent=1 // pred_fallthru
      _
    // Predicated region
    $region30: #{ai_forward.1} parent=1 // pred_check
      _
    $region31: #{ai_forward.1} parent=1 // pred_check_branch
      %75 = sbr.rel (0) target = $region33
    $region32: #{ai_forward.1} parent=1 // pred_region
      %76 = dma.done [#allocation6], 16
    $region33: #{ai_forward.1} parent=1 // pred_fallthru
      _
    // Predicated region
    $region34: #{ai_forward.1} parent=1 // pred_check
      _
    $region35: #{ai_forward.1} parent=1 // pred_check_branch
      %78 = sbr.rel (0) target = $region37
    $region36: #{ai_forward.1} parent=1 // pred_region
      %79 = dma.done [#allocation9], 1024
    $region37: #{ai_forward.1} parent=1 // pred_fallthru
      _
    // Predicated region
    $region38: #{ai_forward.1} parent=1 // pred_check
      _
    $region39: #{ai_forward.1} parent=1 // pred_check_branch
      %81 = sbr.rel (0) target = $region41
    $region40: #{ai_forward.1} parent=1 // pred_region
      %82 = dma.done [#allocation9], 16
    $region41: #{ai_forward.1} parent=1 // pred_fallthru
      _
    %v84 = vld [vmem:[#allocation2] sm:$0xff]
    %v85 = vpack.c.bf16 %v84, %v84
    %v86 = vld [vmem:[#allocation5] sm:$0xf]
    %v87 = vld [vmem:[#allocation5 + $0x4] sm:$0xf]
    %v88 = vld [vmem:[#allocation5 + $0x8] sm:$0xf]
    %v89 = vld [vmem:[#allocation5 + $0xc] sm:$0xf]
    %v90 = vld [vmem:[#allocation5 + $0x10] sm:$0xf]
    %v91 = vld [vmem:[#allocation5 + $0x14] sm:$0xf]
    %v92 = vld [vmem:[#allocation5 + $0x18] sm:$0xf]
    %v93 = vld [vmem:[#allocation5 + $0x1c] sm:$0xf]
    %v94 = vld [vmem:[#allocation5 + $0x20] sm:$0xf]
    %v95 = vld [vmem:[#allocation5 + $0x24] sm:$0xf]
    %v96 = vld [vmem:[#allocation5 + $0x28] sm:$0xf]
    %v97 = vld [vmem:[#allocation5 + $0x2c] sm:$0xf]
    %v98 = vld [vmem:[#allocation5 + $0x30] sm:$0xf]
    %v99 = vld [vmem:[#allocation5 + $0x34] sm:$0xf]
    %v100 = vld [vmem:[#allocation5 + $0x38] sm:$0xf]
    %v101 = vld [vmem:[#allocation5 + $0x3c] sm:$0xf]
    %v102 = vld [vmem:[#allocation7] sm:$0x1]
    %v104 = vlaneseq
    %v105 = vshrl.u32 %v104, 7
    %v106 = vsub.s32 0, %v105
    %v107 = vrot.slane %v102, %v106
    %v125 = vunpack.c.l.b16 %v86
    %v126 = vunpack.c.l.b16 %v87
    %v127 = vunpack.c.l.b16 %v88
    %v128 = vunpack.c.l.b16 %v89
    %v129 = vunpack.c.l.b16 %v90
    %v130 = vunpack.c.l.b16 %v91
    %v131 = vunpack.c.l.b16 %v92
    %v132 = vunpack.c.l.b16 %v93
    %v133 = vunpack.c.l.b16 %v94
    %v134 = vunpack.c.l.b16 %v95
    %v135 = vunpack.c.l.b16 %v96
    %v136 = vunpack.c.l.b16 %v97
    %v137 = vunpack.c.l.b16 %v98
    %v138 = vunpack.c.l.b16 %v99
    %v139 = vunpack.c.l.b16 %v100
    %v140 = vunpack.c.l.b16 %v101
    %v141 = vpack.c.b16 %v126, %v125
    %v142 = vpack.c.b16 %v128, %v127
    %v143 = vpack.c.b16 %v130, %v129
    %v144 = vpack.c.b16 %v132, %v131
    %v145 = vpack.c.b16 %v134, %v133
    %v146 = vpack.c.b16 %v136, %v135
    %v147 = vpack.c.b16 %v138, %v137
    %v148 = vpack.c.b16 %v140, %v139
    %157 = vmatprep.subr.bf16.mxu0 0
    %158 = vmatpush1.bf16.msra.mxu0 %v141
    %159 = vmatprep.subr.bf16.mxu0 0
    %160 = vmatpush1.bf16.msra.mxu0 %v142
    %161 = vmatprep.subr.bf16.mxu0 0
    %162 = vmatpush1.bf16.msra.mxu0 %v143
    %163 = vmatprep.subr.bf16.mxu0 0
    %164 = vmatpush1.bf16.msra.mxu0 %v144
    %165 = vmatprep.subr.bf16.mxu0 0
    %166 = vmatpush1.bf16.msra.mxu0 %v145
    %167 = vmatprep.subr.bf16.mxu0 0
    %168 = vmatpush1.bf16.msra.mxu0 %v146
    %169 = vmatprep.subr.bf16.mxu0 0
    %170 = vmatpush1.bf16.msra.mxu0 %v147
    %171 = vmatprep.subr.bf16.mxu0 0
    %172 = vmatpush1.bf16.msra.mxu0 %v148
    %173 = vmatprep.subr.bf16.mxu0 0
    %174 = vmatpush1.bf16.msra.mxu0 0
    %175 = vmatprep.subr.bf16.mxu0 0
    %176 = vmatpush1.bf16.msra.mxu0 0
    %177 = vmatprep.subr.bf16.mxu0 0
    %178 = vmatpush1.bf16.msra.mxu0 0
    %179 = vmatprep.subr.bf16.mxu0 0
    %180 = vmatpush1.bf16.msra.mxu0 0
    %181 = vmatprep.subr.bf16.mxu0 0
    %182 = vmatpush1.bf16.msra.mxu0 0
    %183 = vmatprep.subr.bf16.mxu0 0
    %184 = vmatpush1.bf16.msra.mxu0 0
    %185 = vmatprep.subr.bf16.mxu0 0
    %186 = vmatpush1.bf16.msra.mxu0 0
    %187 = vmatprep.subr.bf16.mxu0 0
    %188 = vmatpush1.bf16.msra.mxu0 0
    %189 = vmatprep.mubr.bf16.mxu0 0
    %190 = vmatmul.mubr.bf16.gmra.mrb[0].mxu0 %v85
    %v191 = vpop.f32.mrb[0].mxu0
    %v192 = vadd.f32 %v107, %v191
    %v193 = vpop.f32.mrb[0].mxu0
    %v194 = vpop.f32.mrb[0].mxu0
    %v195 = vpop.f32.mrb[0].mxu0
    %196 = vdwg.mxu0
    %v197 = vmax.f32 %v192, 0.0
    %v198 = vpack.c.bf16 %v197, %v197
    %v199 = vld [vmem:[#allocation8] sm:$0xf]
    %v200 = vld [vmem:[#allocation8 + $0x4] sm:$0xf]
    %v201 = vld [vmem:[#allocation8 + $0x8] sm:$0xf]
    %v202 = vld [vmem:[#allocation8 + $0xc] sm:$0xf]
    %v203 = vld [vmem:[#allocation8 + $0x10] sm:$0xf]
    %v204 = vld [vmem:[#allocation8 + $0x14] sm:$0xf]
    %v205 = vld [vmem:[#allocation8 + $0x18] sm:$0xf]
    %v206 = vld [vmem:[#allocation8 + $0x1c] sm:$0xf]
    %v207 = vld [vmem:[#allocation8 + $0x20] sm:$0xf]
    %v208 = vld [vmem:[#allocation8 + $0x24] sm:$0xf]
    %v209 = vld [vmem:[#allocation8 + $0x28] sm:$0xf]
    %v210 = vld [vmem:[#allocation8 + $0x2c] sm:$0xf]
    %v211 = vld [vmem:[#allocation8 + $0x30] sm:$0xf]
    %v212 = vld [vmem:[#allocation8 + $0x34] sm:$0xf]
    %v213 = vld [vmem:[#allocation8 + $0x38] sm:$0xf]
    %v214 = vld [vmem:[#allocation8 + $0x3c] sm:$0xf]
    %v215 = vld [vmem:[#allocation10] sm:$0x1]
    %v217 = vlaneseq
    %v218 = vshrl.u32 %v217, 7
    %v219 = vsub.s32 0, %v218
    %v220 = vrot.slane %v215, %v219
    %v238 = vunpack.c.l.b16 %v199
    %v239 = vunpack.c.l.b16 %v200
    %v240 = vunpack.c.l.b16 %v201
    %v241 = vunpack.c.l.b16 %v202
    %v242 = vunpack.c.l.b16 %v203
    %v243 = vunpack.c.l.b16 %v204
    %v244 = vunpack.c.l.b16 %v205
    %v245 = vunpack.c.l.b16 %v206
    %v246 = vunpack.c.l.b16 %v207
    %v247 = vunpack.c.l.b16 %v208
    %v248 = vunpack.c.l.b16 %v209
    %v249 = vunpack.c.l.b16 %v210
    %v250 = vunpack.c.l.b16 %v211
    %v251 = vunpack.c.l.b16 %v212
    %v252 = vunpack.c.l.b16 %v213
    %v253 = vunpack.c.l.b16 %v214
    %v254 = vpack.c.b16 %v239, %v238
    %v255 = vpack.c.b16 %v241, %v240
    %v256 = vpack.c.b16 %v243, %v242
    %v257 = vpack.c.b16 %v245, %v244
    %v258 = vpack.c.b16 %v247, %v246
    %v259 = vpack.c.b16 %v249, %v248
    %v260 = vpack.c.b16 %v251, %v250
    %v261 = vpack.c.b16 %v253, %v252
    %270 = vmatprep.subr.bf16.mxu0 0
    %271 = vmatpush1.bf16.msra.mxu0 %v254
    %272 = vmatprep.subr.bf16.mxu0 0
    %273 = vmatpush1.bf16.msra.mxu0 %v255
    %274 = vmatprep.subr.bf16.mxu0 0
    %275 = vmatpush1.bf16.msra.mxu0 %v256
    %276 = vmatprep.subr.bf16.mxu0 0
    %277 = vmatpush1.bf16.msra.mxu0 %v257
    %278 = vmatprep.subr.bf16.mxu0 0
    %279 = vmatpush1.bf16.msra.mxu0 %v258
    %280 = vmatprep.subr.bf16.mxu0 0
    %281 = vmatpush1.bf16.msra.mxu0 %v259
    %282 = vmatprep.subr.bf16.mxu0 0
    %283 = vmatpush1.bf16.msra.mxu0 %v260
    %284 = vmatprep.subr.bf16.mxu0 0
    %285 = vmatpush1.bf16.msra.mxu0 %v261
    %286 = vmatprep.subr.bf16.mxu0 0
    %287 = vmatpush1.bf16.msra.mxu0 0
    %288 = vmatprep.subr.bf16.mxu0 0
    %289 = vmatpush1.bf16.msra.mxu0 0
    %290 = vmatprep.subr.bf16.mxu0 0
    %291 = vmatpush1.bf16.msra.mxu0 0
    %292 = vmatprep.subr.bf16.mxu0 0
    %293 = vmatpush1.bf16.msra.mxu0 0
    %294 = vmatprep.subr.bf16.mxu0 0
    %295 = vmatpush1.bf16.msra.mxu0 0
    %296 = vmatprep.subr.bf16.mxu0 0
    %297 = vmatpush1.bf16.msra.mxu0 0
    %298 = vmatprep.subr.bf16.mxu0 0
    %299 = vmatpush1.bf16.msra.mxu0 0
    %300 = vmatprep.subr.bf16.mxu0 0
    %301 = vmatpush1.bf16.msra.mxu0 0
    %302 = vmatprep.mubr.bf16.mxu0 0
    %303 = vmatmul.mubr.bf16.gmra.mrb[0].mxu0 %v198
    %v304 = vpop.f32.mrb[0].mxu0
    %v305 = vadd.f32 %v220, %v304
    %v306 = vpop.f32.mrb[0].mxu0
    %v307 = vpop.f32.mrb[0].mxu0
    %v308 = vpop.f32.mrb[0].mxu0
    %309 = vdwg.mxu0
    %310 = vst [vmem:[#allocation11] sm:$0xff] %v305
    // Predicated region
    $region42: #{ai_forward.1} parent=1 // pred_check
      _
    $region43: #{ai_forward.1} parent=1 // pred_check_branch
      %312 = sbr.rel (0) target = $region45
    $region44: #{ai_forward.1} parent=1 // pred_region
      %s314 = ssub.s32 128, 128
      %315 = vsyncadd [#allocation4], %s314
      %s317 = sshll.u32 [#allocation11], 4
      %s318 = int_to_ptr.vmem [resolvable:$true] %s317
      %320 = dma.vmem_to_hbm [thread:$0]  %s318, 128, %s5, [#allocation4]
    $region45: #{ai_forward.1} parent=1 // pred_fallthru
      _
    // Predicated region
    $region46: #{ai_forward.1} parent=1 // pred_check
      _
    $region47: #{ai_forward.1} parent=1 // pred_check_branch
      %322 = sbr.rel (0) target = $region49
    $region48: #{ai_forward.1} parent=1 // pred_region
      %323 = dma.done [#allocation4], 128
    $region49: #{ai_forward.1} parent=1 // pred_fallthru
      _
    %324 = vsyncpa [#allocation3], 1
    %325 = vsyncpa [#allocation6], 1
    %326 = vsyncpa [#allocation9], 1
    %327 = vsyncpa [#allocation4], 1

</llo_original>
